<compile_context>
chip_gen: v7x
topology: tpu7x:2x2x1
jax: 0.10.0
libtpu: 0.0.40
codegen_flags: <defaults>
</compile_context>

<pallas_src>
import functools
from typing import NamedTuple

import jax
import jax.numpy as jnp
from jax.experimental import pallas as pl
from jax.experimental.pallas import tpu as pltpu


def _round_up(v, m):
    return ((v + m - 1) // m) * m


def _tile_plan(num_dst, num_src, in_dim, n_pad):
    """Generation- and VMEM-budget-aware (tm, tk, vmem_limit_bytes)."""
    vmem_cap = 128 << 20
    try:
        vmem_cap = int(getattr(pltpu.get_tpu_info(), "vmem_capacity_bytes", vmem_cap))
    except Exception:
        pass
    if vmem_cap >= (96 << 20):          # v5e / v6e: 128 MiB physical VMEM, 1 TC
        vmem_limit = 96 << 20
        tm_cap, tk_cap = 1024, 2048
        multi_core = False
    else:                               # v7x: 64 MiB physical VMEM, 2 TensorCores
        vmem_limit = 48 << 20
        tm_cap, tk_cap = 256, 2048
        multi_core = True
    budget = vmem_limit - (6 << 20)     # headroom for compiler-internal scratch

    tm = min(tm_cap, _round_up(num_dst, 32))     # 32: int8 sublane packing
    if multi_core and tm > 32 and _round_up(num_dst, tm) // tm < 2:
        # ensure >= 2 tiles on the "parallel" M axis so both TensorCores get work
        tm = max(32, _round_up(tm // 2, 32))
    tk = min(tk_cap, _round_up(num_src, 128))    # 128: lane width

    def _fits(tm_, tk_):
        fixed = 2 * (2 * in_dim * n_pad * 2)     # W_self + W_neigh bf16, double-buffered
        fixed += 2 * n_pad * 4                   # bias f32
        per = 2 * tm_ * tk_                      # adj int8, double-buffered
        per += 2 * tk_ * in_dim * 2              # x (src) bf16
        per += 2 * tm_ * in_dim * 2              # x_dst bf16
        per += 2 * tm_ * 4                       # deg_inv f32
        per += tm_ * in_dim * 4                  # acc scratch f32
        per += 2 * tm_ * n_pad * 4               # out (<= f32)
        return fixed + per <= budget

    while tk > 128 and not _fits(tm, tk):
        tk = _round_up(tk // 2, 128)
    while tm > 32 and not _fits(tm, tk):
        tm = max(32, _round_up(tm // 2, 32))
    return tm, tk, vmem_limit


class PreparedBlock(NamedTuple):
    """One-time preprocessed block (done at block construction, not per layer call)."""
    adj_q: jax.Array        # [m_pad, k_pad] int8 {0,1} neighbor mask, zero padded
    deg_inv: jax.Array      # [m_pad, 1]     f32 1 / in-degree per destination node
    num_dst: int
    num_src: int
    tm: int
    tk: int
    vmem_limit: int


def _sage_layer_kernel(adj_ref, x_ref, xdst_ref, dinv_ref, ws_ref, wn_ref, b_ref,
                       o_ref, acc_ref, *, apply_relu: bool):
    """One (M-tile, K-tile) grid step of a fused SAGEConv(mean) layer.

    adj_ref:  [TM, TK]       int8 {0,1} neighbor-mask tile
    x_ref:    [TK, in_dim]   bf16 source-feature tile (K axis)
    xdst_ref: [TM, in_dim]   bf16 destination-feature tile (M axis)
    dinv_ref: [TM, 1]        f32 1/in-degree (mean normalization)
    ws_ref:   [in_dim, Npad] bf16 W_self (lane padded)
    wn_ref:   [in_dim, Npad] bf16 W_neigh (lane padded)
    b_ref:    [1, Npad]      f32 bias (lane padded)
    o_ref:    [TM, Npad]     bf16 (hidden) / f32 (final) output tile, lane dense
    acc_ref:  [TM, in_dim]   f32 VMEM accumulator for mask @ x
    """
    k = pl.program_id(1)

    # K-tiled sum over in-neighbors: bf16 MXU inputs, f32 accumulation.
    prod = jnp.dot(adj_ref[...].astype(jnp.bfloat16), x_ref[...],
                   preferred_element_type=jnp.float32)

    @pl.when(k == 0)
    def _():
        acc_ref[...] = prod            # store first partial directly (no zero-init)

    @pl.when(k != 0)
    def _():
        acc_ref[...] += prod

    @pl.when(k == pl.num_programs(1) - 1)
    def _():
        # exact mean: f32 1/deg scaling of the accumulated neighbor sum
        neigh = (acc_ref[...] * dinv_ref[...]).astype(jnp.bfloat16)
        # projection as two bf16 MXU matmuls into one f32 result (no concat)
        h = jnp.dot(xdst_ref[...], ws_ref[...], preferred_element_type=jnp.float32)
        h = h + jnp.dot(neigh, wn_ref[...], preferred_element_type=jnp.float32)
        h = h + b_ref[...]
        if apply_relu:
            h = jnp.maximum(h, 0.0)
        o_ref[...] = h.astype(o_ref.dtype)


def sage_conv_pallas(blk: PreparedBlock, x, kparams, *, apply_relu, out_dtype):
    """One SAGEConv(mean) layer as a tiled, double-buffered pallas_call."""
    adj_q, dinv, num_dst, num_src, tm, tk, vmem_limit = blk
    ws_b, wn_b, b_p, in_dim, out_dim, n_pad = kparams
    m_pad, k_pad = adj_q.shape
    assert x.shape[1] == in_dim

    # Activations are small relative to the adjacency stream; pad in bf16 per call
    # (previous hidden layers already emit bf16, so the cast is a no-op after layer 0).
    x_b = x.astype(jnp.bfloat16)
    x_p = jnp.pad(x_b, ((0, k_pad - num_src), (0, 0)))
    xdst_p = jnp.pad(x_b[:num_dst], ((0, m_pad - num_dst), (0, 0)))

    grid = (m_pad // tm, k_pad // tk)
    kernel = functools.partial(_sage_layer_kernel, apply_relu=apply_relu)

    out = pl.pallas_call(
        kernel,
        out_shape=jax.ShapeDtypeStruct((m_pad, n_pad), out_dtype),
        grid=grid,
        in_specs=[
            pl.BlockSpec((tm, tk), lambda i, k: (i, k)),            # adj mask (int8)
            pl.BlockSpec((tk, in_dim), lambda i, k: (k, 0)),        # x (src, bf16)
            pl.BlockSpec((tm, in_dim), lambda i, k: (i, 0)),        # x_dst (bf16)
            pl.BlockSpec((tm, 1), lambda i, k: (i, 0)),             # 1/deg (f32)
            pl.BlockSpec((in_dim, n_pad), lambda i, k: (0, 0)),     # W_self (bf16)
            pl.BlockSpec((in_dim, n_pad), lambda i, k: (0, 0)),     # W_neigh (bf16)
            pl.BlockSpec((1, n_pad), lambda i, k: (0, 0)),          # bias (f32)
        ],
        out_specs=pl.BlockSpec((tm, n_pad), lambda i, k: (i, 0)),
        scratch_shapes=[pltpu.VMEM((tm, in_dim), jnp.float32)],
        compiler_params=pltpu.CompilerParams(
            dimension_semantics=("parallel", "arbitrary"),
            vmem_limit_bytes=vmem_limit),
    )(adj_q, x_p, xdst_p, dinv, ws_b, wn_b, b_p)

    return out[:num_dst, :out_dim]


class DataParallelStagePallas:
    """Data-parallel GraphSAGE stage: (n_layers-1) hidden SAGEConv + 1 output SAGEConv."""

    def __init__(self, n_hidden, n_classes, n_layers, dropout=0.5, key=None):
        self.n_layers = n_layers
        self.n_hidden = n_hidden
        self.n_classes = n_classes
        self.dropout = dropout  # eval mode -> identity (see TODO above)

        if key is None:
            key = jax.random.PRNGKey(0)
        self.params = []     # f32 originals (reference / export)
        self._kparams = []   # one-time padded bf16 kernel weights
        dims = [(n_hidden, n_hidden)] * (n_layers - 1) + [(n_hidden, n_classes)]
        for (din, dout) in dims:
            key, k1, k2 = jax.random.split(key, 3)
            scale = 1.0 / jnp.sqrt(jnp.float32(din))
            w_self = jax.random.uniform(k1, (din, dout), jnp.float32,
                                        minval=-scale, maxval=scale)
            w_neigh = jax.random.uniform(k2, (din, dout), jnp.float32,
                                         minval=-scale, maxval=scale)
            bias = jnp.zeros((dout,), jnp.float32)
            self.params.append((w_self, w_neigh, bias))

            n_pad = _round_up(dout, 128)           # lane-dense output stores
            ws_b = jnp.zeros((din, n_pad), jnp.bfloat16)
            ws_b = ws_b.at[:, :dout].set(w_self.astype(jnp.bfloat16))
            wn_b = jnp.zeros((din, n_pad), jnp.bfloat16)
            wn_b = wn_b.at[:, :dout].set(w_neigh.astype(jnp.bfloat16))
            b_p = jnp.zeros((1, n_pad), jnp.float32)
            b_p = b_p.at[0, :dout].set(bias)
            self._kparams.append((ws_b, wn_b, b_p, din, dout, n_pad))

    def prepare_blocks(self, blocks):
        """One-time conversion of blocks to padded int8 masks + f32 deg_inv.

        Accepts: PreparedBlock (passed through), (mask, deg_inv) tuples, or dense
        (optionally row-normalized) adjacency matrices [num_dst, num_src].
        """
        prepared = []
        for l, blk in enumerate(blocks):
            if isinstance(blk, PreparedBlock):
                prepared.append(blk)
                continue
            if isinstance(blk, (tuple, list)) and len(blk) == 2:
                mask, deg_inv = blk
                mask = jnp.asarray(mask)
                deg_inv = jnp.asarray(deg_inv, jnp.float32).reshape(mask.shape[0], 1)
            else:
                adj = jnp.asarray(blk, jnp.float32)
                mask = (adj != 0)
                deg = mask.sum(axis=1, keepdims=True).astype(jnp.float32)
                deg_inv = jnp.where(deg > 0, 1.0 / jnp.maximum(deg, 1.0), 0.0)
            mask = (mask != 0).astype(jnp.int8)
            num_dst, num_src = mask.shape

            din = self.n_hidden
            dout = self.n_classes if l == self.n_layers - 1 else self.n_hidden
            n_pad = _round_up(dout, 128)
            tm, tk, vmem_limit = _tile_plan(num_dst, num_src, din, n_pad)
            m_pad, k_pad = _round_up(num_dst, tm), _round_up(num_src, tk)

            adj_q = jnp.zeros((m_pad, k_pad), jnp.int8)
            adj_q = adj_q.at[:num_dst, :num_src].set(mask)
            dinv = jnp.zeros((m_pad, 1), jnp.float32)
            dinv = dinv.at[:num_dst, :].set(deg_inv)
            prepared.append(PreparedBlock(adj_q, dinv, num_dst, num_src,
                                          tm, tk, vmem_limit))
        return prepared

    def __call__(self, blocks, x):
        blocks = self.prepare_blocks(blocks)   # no-op for already-prepared blocks
        for l, (blk, kp) in enumerate(zip(blocks, self._kparams)):
            assert blk.num_src == x.shape[0], (
                'number of nodes {} is not equal to the number of features {}!'
                .format(blk.num_src, x.shape[0]))
            last = (l == self.n_layers - 1)
            x = sage_conv_pallas(blk, x, kp, apply_relu=not last,
                                 out_dtype=jnp.float32 if last else jnp.bfloat16)
            # dropout: identity in eval/inference mode (see TODO above)
        return x


def _make_block(key, num_dst, num_src, p=0.3):
    """Random bipartite block as an int8 {0,1} mask + f32 1/deg (mean reduce)."""
    mask = jax.random.uniform(key, (num_dst, num_src)) < p
    deg = jnp.maximum(mask.sum(axis=1, keepdims=True).astype(jnp.float32), 1.0)
    return mask.astype(jnp.int8), 1.0 / deg


def _ref_forward(raw_blocks, x, params, n_layers):
    """Pure-JAX f32 reference for correctness checking."""
    for l, ((mask, deg_inv), (ws, wn, b)) in enumerate(zip(raw_blocks, params)):
        adj = mask.astype(jnp.float32) * deg_inv
        neigh = adj @ x
        h = x[:adj.shape[0]] @ ws + neigh @ wn + b
        if l != n_layers - 1:
            h = jnp.maximum(h, 0.0)
        x = h
    return x


if __name__ == "__main__":
    n_hidden, n_classes, n_layers = 32, 8, 2
    num_src0, num_dst0, num_dst1 = 64, 48, 16

    root = jax.random.PRNGKey(0)
    k_feat, k_b0, k_b1, k_params = jax.random.split(root, 4)

    # input features for the source nodes of the first block
    x = jax.random.normal(k_feat, (num_src0, n_hidden), jnp.float32)

    # two chained blocks: layer0 (64 src -> 48 dst), layer1 (48 src -> 16 dst)
    raw_blocks = [
        _make_block(k_b0, num_dst0, num_src0),
        _make_block(k_b1, num_dst1, num_dst0),
    ]

    model = DataParallelStagePallas(n_hidden, n_classes, n_layers,
                                    dropout=0.5, key=k_params)

    # one-time block preprocessing (int8 mask + deg_inv, padded to tile multiples)
    blocks = model.prepare_blocks(raw_blocks)

    out = jax.block_until_ready(model(blocks, x))
    assert out.shape == (num_dst1, n_classes)
    assert bool(jnp.all(jnp.isfinite(out)))

    ref = _ref_forward(raw_blocks, x, model.params, n_layers)
    max_err = float(jnp.max(jnp.abs(out - ref)))
    assert bool(jnp.allclose(out, ref, rtol=5e-2, atol=5e-2)), max_err

    print("KERNEL_OK")
</pallas_src>

<mosaic_0001>
module attributes {stable_mosaic.version = 11 : i64} {
  func.func @_sage_layer_kernel(%arg0: i32, %arg1: i32, %arg2: memref<64x128xi8, #tpu.memory_space<vmem>>, %arg3: memref<128x32xbf16, #tpu.memory_space<vmem>>, %arg4: memref<64x32xbf16, #tpu.memory_space<vmem>>, %arg5: memref<64x1xf32, #tpu.memory_space<vmem>>, %arg6: memref<32x128xbf16, #tpu.memory_space<vmem>>, %arg7: memref<32x128xbf16, #tpu.memory_space<vmem>>, %arg8: memref<1x128xf32, #tpu.memory_space<vmem>>, %arg9: memref<64x128xbf16, #tpu.memory_space<vmem>>, %arg10: memref<64x32xf32, #tpu.memory_space<vmem>>) attributes {dimension_semantics = [#tpu.dimension_semantics<parallel>, #tpu.dimension_semantics<arbitrary>], iteration_bounds = array<i64: 1, 1>, scalar_prefetch = 0 : i64, scratch_operands = 1 : i64, tpu.core_type = #tpu.core_type<tc>, window_params = [{transform_indices = @transform_0, window_bounds = array<i64: 64, 128>}, {transform_indices = @transform_1, window_bounds = array<i64: 128, 32>}, {transform_indices = @transform_2, window_bounds = array<i64: 64, 32>}, {transform_indices = @transform_3, window_bounds = array<i64: 64, 1>}, {pipeline_mode = #tpu.pipeline_mode<synchronous>, transform_indices = @transform_4, window_bounds = array<i64: 32, 128>}, {pipeline_mode = #tpu.pipeline_mode<synchronous>, transform_indices = @transform_5, window_bounds = array<i64: 32, 128>}, {pipeline_mode = #tpu.pipeline_mode<synchronous>, transform_indices = @transform_6, window_bounds = array<i64: 1, 128>}, {transform_indices = @transform_7, window_bounds = array<i64: 64, 128>}]} {
    %c0 = arith.constant 0 : index
    %c0_0 = arith.constant 0 : index
    %0 = vector.load %arg2[%c0, %c0_0] : memref<64x128xi8, #tpu.memory_space<vmem>>, vector<64x128xi8>
    %1 = arith.sitofp %0 : vector<64x128xi8> to vector<64x128xbf16>
    %c0_1 = arith.constant 0 : index
    %c0_2 = arith.constant 0 : index
    %2 = vector.load %arg3[%c0_1, %c0_2] : memref<128x32xbf16, #tpu.memory_space<vmem>>, vector<128x32xbf16>
    %cst = arith.constant dense<0.000000e+00> : vector<64x32xf32>
    %3 = tpu.matmul %1, %2, %cst {dimension_numbers = #tpu.dot_dimension_numbers<[1], [0], [0], [1], [0, 0, 1, 1], [], []>} : vector<64x128xbf16>, vector<128x32xbf16>, vector<64x32xf32> -> vector<64x32xf32>
    %c0_i32 = arith.constant 0 : i32
    %4 = arith.cmpi eq, %arg1, %c0_i32 : i32
    %5 = arith.extui %4 : i1 to i32
    %c0_i32_3 = arith.constant 0 : i32
    %6 = arith.cmpi ne, %5, %c0_i32_3 : i32
    scf.if %6 {
      %c0_8 = arith.constant 0 : index
      %c0_9 = arith.constant 0 : index
      %13 = vector.load %arg10[%c0_8, %c0_9] : memref<64x32xf32, #tpu.memory_space<vmem>>, vector<64x32xf32>
      tpu.vector_store %arg10[%c0_8, %c0_9], %3 {strides = array<i32>} : memref<64x32xf32, #tpu.memory_space<vmem>>, vector<64x32xf32>,
    } else {
    }
    %c0_i32_4 = arith.constant 0 : i32
    %7 = arith.cmpi ne, %arg1, %c0_i32_4 : i32
    %8 = arith.extui %7 : i1 to i32
    %c0_i32_5 = arith.constant 0 : i32
    %9 = arith.cmpi ne, %8, %c0_i32_5 : i32
    scf.if %9 {
      %c0_8 = arith.constant 0 : index
      %c0_9 = arith.constant 0 : index
      %13 = vector.load %arg10[%c0_8, %c0_9] : memref<64x32xf32, #tpu.memory_space<vmem>>, vector<64x32xf32>
      %14 = arith.addf %13, %3 : vector<64x32xf32>
      %c0_10 = arith.constant 0 : index
      %c0_11 = arith.constant 0 : index
      %15 = vector.load %arg10[%c0_10, %c0_11] : memref<64x32xf32, #tpu.memory_space<vmem>>, vector<64x32xf32>
      tpu.vector_store %arg10[%c0_10, %c0_11], %14 {strides = array<i32>} : memref<64x32xf32, #tpu.memory_space<vmem>>, vector<64x32xf32>,
    } else {
    }
    %c0_i32_6 = arith.constant 0 : i32
    %10 = arith.cmpi eq, %arg1, %c0_i32_6 : i32
    %11 = arith.extui %10 : i1 to i32
    %c0_i32_7 = arith.constant 0 : i32
    %12 = arith.cmpi ne, %11, %c0_i32_7 : i32
    scf.if %12 {
      %c0_8 = arith.constant 0 : index
      %c0_9 = arith.constant 0 : index
      %13 = vector.load %arg10[%c0_8, %c0_9] : memref<64x32xf32, #tpu.memory_space<vmem>>, vector<64x32xf32>
      %c0_10 = arith.constant 0 : index
      %c0_11 = arith.constant 0 : index
      %14 = vector.load %arg5[%c0_10, %c0_11] : memref<64x1xf32, #tpu.memory_space<vmem>>, vector<64x1xf32>
      %15 = vector.broadcast %14 : vector<64x1xf32> to vector<64x32xf32>
      %16 = arith.mulf %13, %15 : vector<64x32xf32>
      %17 = arith.truncf %16 : vector<64x32xf32> to vector<64x32xbf16>
      %c0_12 = arith.constant 0 : index
      %c0_13 = arith.constant 0 : index
      %18 = vector.load %arg4[%c0_12, %c0_13] : memref<64x32xbf16, #tpu.memory_space<vmem>>, vector<64x32xbf16>
      %c0_14 = arith.constant 0 : index
      %c0_15 = arith.constant 0 : index
      %19 = vector.load %arg6[%c0_14, %c0_15] : memref<32x128xbf16, #tpu.memory_space<vmem>>, vector<32x128xbf16>
      %cst_16 = arith.constant dense<0.000000e+00> : vector<64x128xf32>
      %20 = tpu.matmul %18, %19, %cst_16 {dimension_numbers = #tpu.dot_dimension_numbers<[1], [0], [0], [1], [0, 0, 1, 1], [], []>} : vector<64x32xbf16>, vector<32x128xbf16>, vector<64x128xf32> -> vector<64x128xf32>
      %c0_17 = arith.constant 0 : index
      %c0_18 = arith.constant 0 : index
      %21 = vector.load %arg7[%c0_17, %c0_18] : memref<32x128xbf16, #tpu.memory_space<vmem>>, vector<32x128xbf16>
      %cst_19 = arith.constant dense<0.000000e+00> : vector<64x128xf32>
      %22 = tpu.matmul %17, %21, %cst_19 {dimension_numbers = #tpu.dot_dimension_numbers<[1], [0], [0], [1], [0, 0, 1, 1], [], []>} : vector<64x32xbf16>, vector<32x128xbf16>, vector<64x128xf32> -> vector<64x128xf32>
      %23 = arith.addf %20, %22 : vector<64x128xf32>
      %c0_20 = arith.constant 0 : index
      %c0_21 = arith.constant 0 : index
      %24 = vector.load %arg8[%c0_20, %c0_21] : memref<1x128xf32, #tpu.memory_space<vmem>>, vector<1x128xf32>
      %25 = vector.broadcast %24 : vector<1x128xf32> to vector<64x128xf32>
      %26 = arith.addf %23, %25 : vector<64x128xf32>
      %cst_22 = arith.constant 0.000000e+00 : f32
      %27 = vector.broadcast %cst_22 : f32 to vector<64x128xf32>
      %28 = arith.maximumf %26, %27 : vector<64x128xf32>
      %29 = arith.truncf %28 : vector<64x128xf32> to vector<64x128xbf16>
      %c0_23 = arith.constant 0 : index
      %c0_24 = arith.constant 0 : index
      %30 = vector.load %arg9[%c0_23, %c0_24] : memref<64x128xbf16, #tpu.memory_space<vmem>>, vector<64x128xbf16>
      tpu.vector_store %arg9[%c0_23, %c0_24], %29 {strides = array<i32>} : memref<64x128xbf16, #tpu.memory_space<vmem>>, vector<64x128xbf16>,
    } else {
    }
    return
  }
  func.func @transform_0(%arg0: i32, %arg1: i32) -> (i32, i32) {
    %c0_i32 = arith.constant 0 : i32
    return %arg0, %arg1 : i32, i32
  }
  func.func @transform_1(%arg0: i32, %arg1: i32) -> (i32, i32) {
    %c0_i32 = arith.constant 0 : i32
    %c0_i32_0 = arith.constant 0 : i32
    return %arg1, %c0_i32 : i32, i32
  }
  func.func @transform_2(%arg0: i32, %arg1: i32) -> (i32, i32) {
    %c0_i32 = arith.constant 0 : i32
    %c0_i32_0 = arith.constant 0 : i32
    return %arg0, %c0_i32 : i32, i32
  }
  func.func @transform_3(%arg0: i32, %arg1: i32) -> (i32, i32) {
    %c0_i32 = arith.constant 0 : i32
    %c0_i32_0 = arith.constant 0 : i32
    return %arg0, %c0_i32 : i32, i32
  }
  func.func @transform_4(%arg0: i32, %arg1: i32) -> (i32, i32) {
    %c0_i32 = arith.constant 0 : i32
    %c0_i32_0 = arith.constant 0 : i32
    %c0_i32_1 = arith.constant 0 : i32
    return %c0_i32, %c0_i32_0 : i32, i32
  }
  func.func @transform_5(%arg0: i32, %arg1: i32) -> (i32, i32) {
    %c0_i32 = arith.constant 0 : i32
    %c0_i32_0 = arith.constant 0 : i32
    %c0_i32_1 = arith.constant 0 : i32
    return %c0_i32, %c0_i32_0 : i32, i32
  }
  func.func @transform_6(%arg0: i32, %arg1: i32) -> (i32, i32) {
    %c0_i32 = arith.constant 0 : i32
    %c0_i32_0 = arith.constant 0 : i32
    %c0_i32_1 = arith.constant 0 : i32
    return %c0_i32, %c0_i32_0 : i32, i32
  }
  func.func @transform_7(%arg0: i32, %arg1: i32) -> (i32, i32) {
    %c0_i32 = arith.constant 0 : i32
    %c0_i32_0 = arith.constant 0 : i32
    return %arg0, %c0_i32 : i32, i32
  }
}

</mosaic_0001>

<llo_original>
// kernel: tpu_custom_call.1
$region0: #{tpu_custom_call.1}
  #allocation0 [shape = 'u32[]', space=smem, size = 0x4, offset = 0x4, fixed_abs, tag = 'smem constant byte address 0x4 - core index']
  #allocation1 [shape = 'u32[144,128]{1,0:T(1,128)}', space=vmem, size = 0x12000, scoped, tag = 'internal scratch']
  #allocation2 [shape = 'f32[64,32]{1,0:T(8,128)}', space=vmem, size = 0x8000, scoped, tag = 'scratch operand']
  %s0 = inlined_call_operand.hbm [shape: s8[64,128], index: 0, kind: input, shape index: {}]
  %s1 = inlined_call_operand.hbm [shape: bf16[128,32], index: 1, kind: input, shape index: {}]
  %s2 = inlined_call_operand.hbm [shape: bf16[64,32], index: 2, kind: input, shape index: {}]
  %s3 = inlined_call_operand.hbm [shape: f32[64,1], index: 3, kind: input, shape index: {}]
  %s4 = inlined_call_operand.hbm [shape: bf16[32,128], index: 4, kind: input, shape index: {}]
  %s5 = inlined_call_operand.hbm [shape: bf16[32,128], index: 5, kind: input, shape index: {}]
  %s6 = inlined_call_operand.hbm [shape: f32[1,128], index: 6, kind: input, shape index: {}]
  %s7 = inlined_call_operand.hbm [shape: bf16[64,128], index: 7, kind: output, shape index: {}]
  %s8 = sld [smem:[#allocation0]]
  $region78: #{tpu_custom_call.1} parent=0
    _
  %s10 = ssub.s32 1, %s8
  %s11 = scalar_select 0, %s10, %s8
  $region1: #{tpu_custom_call.1} parent=0
    #allocation3 [shape = 'u8[8192]{0}', space=vmem, size = 0x2000, scoped, tag = 'input window, operand 0, single buffered']
    #allocation4 [shape = 's32[1]{0}', space=sflag, size = 0x4, scoped, tag = 'scoped memory for tpu_custom_call.1']
    #allocation5 [shape = 's32[1]{0}', space=sflag, size = 0x4, scoped, tag = 'scoped memory for tpu_custom_call.1']
    #allocation6 [shape = 'u8[32768]{0}', space=vmem, size = 0x8000, scoped, tag = 'input window, operand 1, single buffered']
    #allocation7 [shape = 's32[1]{0}', space=sflag, size = 0x4, scoped, tag = 'scoped memory for tpu_custom_call.1']
    #allocation8 [shape = 'u8[16384]{0}', space=vmem, size = 0x4000, scoped, tag = 'input window, operand 2, single buffered']
    #allocation9 [shape = 'u8[32768]{0}', space=vmem, size = 0x8000, scoped, tag = 'input window, operand 3, single buffered']
    #allocation10 [shape = 's32[1]{0}', space=sflag, size = 0x4, scoped, tag = 'scoped memory for tpu_custom_call.1']
    #allocation11 [shape = 'u8[8192]{0}', space=vmem, size = 0x2000, scoped, tag = 'input window, operand 4, single buffered']
    #allocation12 [shape = 'u8[8192]{0}', space=vmem, size = 0x2000, scoped, tag = 'input window, operand 5, single buffered']
    #allocation13 [shape = 's32[1]{0}', space=sflag, size = 0x4, scoped, tag = 'scoped memory for tpu_custom_call.1']
    #allocation14 [shape = 'u8[512]{0}', space=vmem, size = 0x400, scoped, tag = 'input window, operand 6, single buffered']
    #allocation15 [shape = 'u8[16384]{0}', space=vmem, size = 0x4000, scoped, tag = 'output window, operand 0, single buffered']
    %12 = vsyncpa [#allocation4], 0
    %13 = vsyncpa [#allocation7], 0
    %14 = vsyncpa [#allocation10], 0
    %15 = vsyncpa [#allocation13], 0
    %16 = vsyncpa [#allocation5], 0
    // Predicated region
    $region2: #{tpu_custom_call.1} parent=1 // pred_check
      _
    $region3: #{tpu_custom_call.1} parent=1 // pred_check_branch
      %18 = sbr.rel (0) target = $region5
    $region4: #{tpu_custom_call.1} parent=1 // pred_region
      %s20 = ssub.s32 256, 256
      %21 = vsyncadd [#allocation4], %s20
      %s22 = sshll.u32 [#allocation3], 4
      %s23 = int_to_ptr.vmem [resolvable:$true] %s22
      %28 = dma.hbm_to_vmem [thread:$0]  %s0, 256, %s23, [#allocation4], 128, 128, 8
    $region5: #{tpu_custom_call.1} parent=1 // pred_fallthru
      _
    // Predicated region
    $region6: #{tpu_custom_call.1} parent=1 // pred_check
      _
    $region7: #{tpu_custom_call.1} parent=1 // pred_check_branch
      %30 = sbr.rel (0) target = $region9
    $region8: #{tpu_custom_call.1} parent=1 // pred_region
      %s32 = ssub.s32 1024, 1024
      %33 = vsyncadd [#allocation7], %s32
      %s34 = sshll.u32 [#allocation6], 4
      %s35 = int_to_ptr.vmem [resolvable:$true] %s34
      %40 = dma.hbm_to_vmem [thread:$0]  %s1, 1024, %s35, [#allocation7], 64, 64, 4
    $region9: #{tpu_custom_call.1} parent=1 // pred_fallthru
      _
    // Predicated region
    $region10: #{tpu_custom_call.1} parent=1 // pred_check
      _
    $region11: #{tpu_custom_call.1} parent=1 // pred_check_branch
      %42 = sbr.rel (0) target = $region13
    $region12: #{tpu_custom_call.1} parent=1 // pred_region
      %s44 = ssub.s32 512, 512
      %45 = vsyncadd [#allocation7], %s44
      %s46 = sshll.u32 [#allocation8], 4
      %s47 = int_to_ptr.vmem [resolvable:$true] %s46
      %52 = dma.hbm_to_vmem [thread:$0]  %s2, 512, %s47, [#allocation7], 64, 64, 4
    $region13: #{tpu_custom_call.1} parent=1 // pred_fallthru
      _
    // Predicated region
    $region14: #{tpu_custom_call.1} parent=1 // pred_check
      _
    $region15: #{tpu_custom_call.1} parent=1 // pred_check_branch
      %54 = sbr.rel (0) target = $region17
    $region16: #{tpu_custom_call.1} parent=1 // pred_region
      %s56 = ssub.s32 1024, 1024
      %57 = vsyncadd [#allocation10], %s56
      %s58 = sshll.u32 [#allocation9], 4
      %s59 = int_to_ptr.vmem [resolvable:$true] %s58
      %64 = dma.hbm_to_vmem [thread:$0]  %s3, 1024, %s59, [#allocation10], 128, 128, 8
    $region17: #{tpu_custom_call.1} parent=1 // pred_fallthru
      _
    // Predicated region
    $region18: #{tpu_custom_call.1} parent=1 // pred_check
      _
    $region19: #{tpu_custom_call.1} parent=1 // pred_check_branch
      %66 = sbr.rel (0) target = $region21
    $region20: #{tpu_custom_call.1} parent=1 // pred_region
      %s68 = ssub.s32 256, 256
      %69 = vsyncadd [#allocation10], %s68
      %s70 = sshll.u32 [#allocation11], 4
      %s71 = int_to_ptr.vmem [resolvable:$true] %s70
      %76 = dma.hbm_to_vmem [thread:$0]  %s4, 256, %s71, [#allocation10], 64, 64, 4
    $region21: #{tpu_custom_call.1} parent=1 // pred_fallthru
      _
    // Predicated region
    $region22: #{tpu_custom_call.1} parent=1 // pred_check
      _
    $region23: #{tpu_custom_call.1} parent=1 // pred_check_branch
      %78 = sbr.rel (0) target = $region25
    $region24: #{tpu_custom_call.1} parent=1 // pred_region
      %s80 = ssub.s32 256, 256
      %81 = vsyncadd [#allocation13], %s80
      %s82 = sshll.u32 [#allocation12], 4
      %s83 = int_to_ptr.vmem [resolvable:$true] %s82
      %88 = dma.hbm_to_vmem [thread:$0]  %s5, 256, %s83, [#allocation13], 64, 64, 4
    $region25: #{tpu_custom_call.1} parent=1 // pred_fallthru
      _
    // Predicated region
    $region26: #{tpu_custom_call.1} parent=1 // pred_check
      _
    $region27: #{tpu_custom_call.1} parent=1 // pred_check_branch
      %90 = sbr.rel (0) target = $region29
    $region28: #{tpu_custom_call.1} parent=1 // pred_region
      %s92 = ssub.s32 16, 16
      %93 = vsyncadd [#allocation13], %s92
      %s95 = sshll.u32 [#allocation14], 4
      %s96 = int_to_ptr.vmem [resolvable:$true] %s95
      %98 = dma.hbm_to_vmem [thread:$0]  %s6, 16, %s96, [#allocation13]
    $region29: #{tpu_custom_call.1} parent=1 // pred_fallthru
      _
    // Predicated region
    $region30: #{tpu_custom_call.1} parent=1 // pred_check
      _
    $region31: #{tpu_custom_call.1} parent=1 // pred_check_branch
      %100 = sbr.rel (0) target = $region33
    $region32: #{tpu_custom_call.1} parent=1 // pred_region
      %101 = dma.done [#allocation4], 256
    $region33: #{tpu_custom_call.1} parent=1 // pred_fallthru
      _
    // Predicated region
    $region34: #{tpu_custom_call.1} parent=1 // pred_check
      _
    $region35: #{tpu_custom_call.1} parent=1 // pred_check_branch
      %103 = sbr.rel (0) target = $region37
    $region36: #{tpu_custom_call.1} parent=1 // pred_region
      %104 = dma.done [#allocation7], 1024
    $region37: #{tpu_custom_call.1} parent=1 // pred_fallthru
      _
    // Predicated region
    $region38: #{tpu_custom_call.1} parent=1 // pred_check
      _
    $region39: #{tpu_custom_call.1} parent=1 // pred_check_branch
      %106 = sbr.rel (0) target = $region41
    $region40: #{tpu_custom_call.1} parent=1 // pred_region
      %107 = dma.done [#allocation7], 512
    $region41: #{tpu_custom_call.1} parent=1 // pred_fallthru
      _
    // Predicated region
    $region42: #{tpu_custom_call.1} parent=1 // pred_check
      _
    $region43: #{tpu_custom_call.1} parent=1 // pred_check_branch
      %109 = sbr.rel (0) target = $region45
    $region44: #{tpu_custom_call.1} parent=1 // pred_region
      %110 = dma.done [#allocation10], 1024
    $region45: #{tpu_custom_call.1} parent=1 // pred_fallthru
      _
    // Predicated region
    $region46: #{tpu_custom_call.1} parent=1 // pred_check
      _
    $region47: #{tpu_custom_call.1} parent=1 // pred_check_branch
      %112 = sbr.rel (0) target = $region49
    $region48: #{tpu_custom_call.1} parent=1 // pred_region
      %113 = dma.done [#allocation10], 256
    $region49: #{tpu_custom_call.1} parent=1 // pred_fallthru
      _
    // Predicated region
    $region50: #{tpu_custom_call.1} parent=1 // pred_check
      _
    $region51: #{tpu_custom_call.1} parent=1 // pred_check_branch
      %115 = sbr.rel (0) target = $region53
    $region52: #{tpu_custom_call.1} parent=1 // pred_region
      %116 = dma.done [#allocation13], 256
    $region53: #{tpu_custom_call.1} parent=1 // pred_fallthru
      _
    // Predicated region
    $region54: #{tpu_custom_call.1} parent=1 // pred_check
      _
    $region55: #{tpu_custom_call.1} parent=1 // pred_check_branch
      %118 = sbr.rel (0) target = $region57
    $region56: #{tpu_custom_call.1} parent=1 // pred_region
      %119 = dma.done [#allocation13], 16
    $region57: #{tpu_custom_call.1} parent=1 // pred_fallthru
      _
    %v121 = vld [vmem:[#allocation3] sm:$0xff]
    %v122 = vld [vmem:[#allocation3 + $0x8] sm:$0xff]
    %v123 = vunpack.c.l.s8.bf16 %v121
    %v124 = vunpack.c.h.s8.bf16 %v121
    %v125 = vunpack.c.l.s8.bf16 %v122
    %v126 = vunpack.c.h.s8.bf16 %v122
    %v127 = vld [vmem:[#allocation6] sm:$0xf]
    %v128 = vld [vmem:[#allocation6 + $0x4] sm:$0xf]
    %v129 = vld [vmem:[#allocation6 + $0x8] sm:$0xf]
    %v130 = vld [vmem:[#allocation6 + $0xc] sm:$0xf]
    %v131 = vld [vmem:[#allocation6 + $0x10] sm:$0xf]
    %v132 = vld [vmem:[#allocation6 + $0x14] sm:$0xf]
    %v133 = vld [vmem:[#allocation6 + $0x18] sm:$0xf]
    %v134 = vld [vmem:[#allocation6 + $0x1c] sm:$0xf]
    %v135 = vld [vmem:[#allocation6 + $0x20] sm:$0xf]
    %v136 = vld [vmem:[#allocation6 + $0x24] sm:$0xf]
    %v137 = vld [vmem:[#allocation6 + $0x28] sm:$0xf]
    %v138 = vld [vmem:[#allocation6 + $0x2c] sm:$0xf]
    %v139 = vld [vmem:[#allocation6 + $0x30] sm:$0xf]
    %v140 = vld [vmem:[#allocation6 + $0x34] sm:$0xf]
    %v141 = vld [vmem:[#allocation6 + $0x38] sm:$0xf]
    %v142 = vld [vmem:[#allocation6 + $0x3c] sm:$0xf]
    %v159 = vunpack.c.l.b16 %v127
    %v160 = vunpack.c.l.b16 %v128
    %v161 = vunpack.c.l.b16 %v129
    %v162 = vunpack.c.l.b16 %v130
    %v163 = vunpack.c.l.b16 %v131
    %v164 = vunpack.c.l.b16 %v132
    %v165 = vunpack.c.l.b16 %v133
    %v166 = vunpack.c.l.b16 %v134
    %v167 = vunpack.c.l.b16 %v135
    %v168 = vunpack.c.l.b16 %v136
    %v169 = vunpack.c.l.b16 %v137
    %v170 = vunpack.c.l.b16 %v138
    %v171 = vunpack.c.l.b16 %v139
    %v172 = vunpack.c.l.b16 %v140
    %v173 = vunpack.c.l.b16 %v141
    %v174 = vunpack.c.l.b16 %v142
    %v175 = vpack.c.b16 %v160, %v159
    %v176 = vpack.c.b16 %v162, %v161
    %v177 = vpack.c.b16 %v164, %v163
    %v178 = vpack.c.b16 %v166, %v165
    %v179 = vpack.c.b16 %v168, %v167
    %v180 = vpack.c.b16 %v170, %v169
    %v181 = vpack.c.b16 %v172, %v171
    %v182 = vpack.c.b16 %v174, %v173
    %191 = vmatprep.subr.bf16.mxu0 0
    %192 = vmatpush1.bf16.msra.mxu0 %v175
    %193 = vmatprep.subr.bf16.mxu0 0
    %194 = vmatpush1.bf16.msra.mxu0 %v176
    %195 = vmatprep.subr.bf16.mxu0 0
    %196 = vmatpush1.bf16.msra.mxu0 %v177
    %197 = vmatprep.subr.bf16.mxu0 0
    %198 = vmatpush1.bf16.msra.mxu0 %v178
    %199 = vmatprep.subr.bf16.mxu0 0
    %200 = vmatpush1.bf16.msra.mxu0 %v179
    %201 = vmatprep.subr.bf16.mxu0 0
    %202 = vmatpush1.bf16.msra.mxu0 %v180
    %203 = vmatprep.subr.bf16.mxu0 0
    %204 = vmatpush1.bf16.msra.mxu0 %v181
    %205 = vmatprep.subr.bf16.mxu0 0
    %206 = vmatpush1.bf16.msra.mxu0 %v182
    %207 = vmatprep.subr.bf16.mxu0 0
    %208 = vmatpush1.bf16.msra.mxu0 0
    %209 = vmatprep.subr.bf16.mxu0 0
    %210 = vmatpush1.bf16.msra.mxu0 0
    %211 = vmatprep.subr.bf16.mxu0 0
    %212 = vmatpush1.bf16.msra.mxu0 0
    %213 = vmatprep.subr.bf16.mxu0 0
    %214 = vmatpush1.bf16.msra.mxu0 0
    %215 = vmatprep.subr.bf16.mxu0 0
    %216 = vmatpush1.bf16.msra.mxu0 0
    %217 = vmatprep.subr.bf16.mxu0 0
    %218 = vmatpush1.bf16.msra.mxu0 0
    %219 = vmatprep.subr.bf16.mxu0 0
    %220 = vmatpush1.bf16.msra.mxu0 0
    %221 = vmatprep.subr.bf16.mxu0 0
    %222 = vmatpush1.bf16.msra.mxu0 0
    %223 = vmatprep.mubr.bf16.mxu0 0
    %224 = vmatmul.mubr.bf16.gmra.mrb[0].mxu0 %v123
    %v225 = vpop.f32.mrb[0].mxu0
    %v226 = vadd.f32 0.0, %v225
    %v227 = vpop.f32.mrb[0].mxu0
    %v228 = vpop.f32.mrb[0].mxu0
    %v229 = vadd.f32 0.0, %v228
    %v230 = vpop.f32.mrb[0].mxu0
    %231 = vmatprep.mubr.bf16.mxu0 0
    %232 = vmatmul.mubr.bf16.gmra.mrb[0].mxu0 %v124
    %v233 = vpop.f32.mrb[0].mxu0
    %v234 = vadd.f32 0.0, %v233
    %v235 = vpop.f32.mrb[0].mxu0
    %v236 = vpop.f32.mrb[0].mxu0
    %v237 = vadd.f32 0.0, %v236
    %v238 = vpop.f32.mrb[0].mxu0
    %239 = vmatprep.mubr.bf16.mxu0 0
    %240 = vmatmul.mubr.bf16.gmra.mrb[0].mxu0 %v125
    %v241 = vpop.f32.mrb[0].mxu0
    %v242 = vadd.f32 0.0, %v241
    %v243 = vpop.f32.mrb[0].mxu0
    %v244 = vpop.f32.mrb[0].mxu0
    %v245 = vadd.f32 0.0, %v244
    %v246 = vpop.f32.mrb[0].mxu0
    %247 = vmatprep.mubr.bf16.mxu0 0
    %248 = vmatmul.mubr.bf16.gmra.mrb[0].mxu0 %v126
    %v249 = vpop.f32.mrb[0].mxu0
    %v250 = vadd.f32 0.0, %v249
    %v251 = vpop.f32.mrb[0].mxu0
    %v252 = vpop.f32.mrb[0].mxu0
    %v253 = vadd.f32 0.0, %v252
    %v254 = vpop.f32.mrb[0].mxu0
    %255 = vdwg.mxu0
    %p256 = scmp.eq.s32.totalorder 0, 0
    // Predicated region
    $region58: #{tpu_custom_call.1} parent=1 // pred_check
      %p257 = pneg %p256
    $region59: #{tpu_custom_call.1} parent=1 // pred_check_branch
      %259 = sbr.rel (%p257) target = $region61
    $region60: #{tpu_custom_call.1} parent=1 // pred_region
      %vm260 = vcmask 261120
      %261 = vst.msk [vmem:[#allocation2] sm:$0xff] %vm260, %v226
      %262 = vst.msk [vmem:[#allocation2 + $0x8] sm:$0xff] %vm260, %v229
      %263 = vst.msk [vmem:[#allocation2 + $0x10] sm:$0xff] %vm260, %v234
      %264 = vst.msk [vmem:[#allocation2 + $0x18] sm:$0xff] %vm260, %v237
      %265 = vst.msk [vmem:[#allocation2 + $0x20] sm:$0xff] %vm260, %v242
      %266 = vst.msk [vmem:[#allocation2 + $0x28] sm:$0xff] %vm260, %v245
      %267 = vst.msk [vmem:[#allocation2 + $0x30] sm:$0xff] %vm260, %v250
      %268 = vst.msk [vmem:[#allocation2 + $0x38] sm:$0xff] %vm260, %v253
    $region61: #{tpu_custom_call.1} parent=1 // pred_fallthru
      _
    %p269 = scmp.ne.s32.totalorder 0, 0
    // Predicated region
    $region62: #{tpu_custom_call.1} parent=1 // pred_check
      %p270 = pneg %p269
    $region63: #{tpu_custom_call.1} parent=1 // pred_check_branch
      %272 = sbr.rel (%p270) target = $region65
    $region64: #{tpu_custom_call.1} parent=1 // pred_region
      %v273 = vld [vmem:[#allocation2] sm:$0xff]
      %v274 = vld [vmem:[#allocation2 + $0x8] sm:$0xff]
      %v275 = vld [vmem:[#allocation2 + $0x10] sm:$0xff]
      %v276 = vld [vmem:[#allocation2 + $0x18] sm:$0xff]
      %v277 = vld [vmem:[#allocation2 + $0x20] sm:$0xff]
      %v278 = vld [vmem:[#allocation2 + $0x28] sm:$0xff]
      %v279 = vld [vmem:[#allocation2 + $0x30] sm:$0xff]
      %v280 = vld [vmem:[#allocation2 + $0x38] sm:$0xff]
      %v281 = vadd.f32 %v273, %v226
      %v282 = vadd.f32 %v274, %v229
      %v283 = vadd.f32 %v275, %v234
      %v284 = vadd.f32 %v276, %v237
      %v285 = vadd.f32 %v277, %v242
      %v286 = vadd.f32 %v278, %v245
      %v287 = vadd.f32 %v279, %v250
      %v288 = vadd.f32 %v280, %v253
      %vm289 = vcmask 261120
      %290 = vst.msk [vmem:[#allocation2] sm:$0xff] %vm289, %v281
      %291 = vst.msk [vmem:[#allocation2 + $0x8] sm:$0xff] %vm289, %v282
      %292 = vst.msk [vmem:[#allocation2 + $0x10] sm:$0xff] %vm289, %v283
      %293 = vst.msk [vmem:[#allocation2 + $0x18] sm:$0xff] %vm289, %v284
      %294 = vst.msk [vmem:[#allocation2 + $0x20] sm:$0xff] %vm289, %v285
      %295 = vst.msk [vmem:[#allocation2 + $0x28] sm:$0xff] %vm289, %v286
      %296 = vst.msk [vmem:[#allocation2 + $0x30] sm:$0xff] %vm289, %v287
      %297 = vst.msk [vmem:[#allocation2 + $0x38] sm:$0xff] %vm289, %v288
    $region65: #{tpu_custom_call.1} parent=1 // pred_fallthru
      _
    // Predicated region
    $region66: #{tpu_custom_call.1} parent=1 // pred_check
      %p298 = pneg %p256
    $region67: #{tpu_custom_call.1} parent=1 // pred_check_branch
      %300 = sbr.rel (%p298) target = $region69
    $region68: #{tpu_custom_call.1} parent=1 // pred_region
      %v301 = vld [vmem:[#allocation2] sm:$0xff]
      %v302 = vld [vmem:[#allocation2 + $0x8] sm:$0xff]
      %v303 = vld [vmem:[#allocation2 + $0x10] sm:$0xff]
      %v304 = vld [vmem:[#allocation2 + $0x18] sm:$0xff]
      %v305 = vld [vmem:[#allocation2 + $0x20] sm:$0xff]
      %v306 = vld [vmem:[#allocation2 + $0x28] sm:$0xff]
      %v307 = vld [vmem:[#allocation2 + $0x30] sm:$0xff]
      %v308 = vld [vmem:[#allocation2 + $0x38] sm:$0xff]
      %v309 = vld [vmem:[#allocation9] sm:$0xff]
      %v310 = vld [vmem:[#allocation9 + $0x8] sm:$0xff]
      %v311 = vld [vmem:[#allocation9 + $0x10] sm:$0xff]
      %v312 = vld [vmem:[#allocation9 + $0x18] sm:$0xff]
      %v313 = vld [vmem:[#allocation9 + $0x20] sm:$0xff]
      %v314 = vld [vmem:[#allocation9 + $0x28] sm:$0xff]
      %v315 = vld [vmem:[#allocation9 + $0x30] sm:$0xff]
      %v316 = vld [vmem:[#allocation9 + $0x38] sm:$0xff]
      %318 = vset.pattern.permute.xlu0 0
      %319 = vperm.xlu0 %318, %v309
      %v320 = vpop.permute.xlu0 %319
      %323 = vset.pattern.permute.xlu0 0
      %324 = vperm.xlu0 %323, %v310
      %v325 = vpop.permute.xlu0 %324
      %328 = vset.pattern.permute.xlu0 0
      %329 = vperm.xlu0 %328, %v311
      %v330 = vpop.permute.xlu0 %329
      %333 = vset.pattern.permute.xlu0 0
      %334 = vperm.xlu0 %333, %v312
      %v335 = vpop.permute.xlu0 %334
      %338 = vset.pattern.permute.xlu0 0
      %339 = vperm.xlu0 %338, %v313
      %v340 = vpop.permute.xlu0 %339
      %343 = vset.pattern.permute.xlu0 0
      %344 = vperm.xlu0 %343, %v314
      %v345 = vpop.permute.xlu0 %344
      %348 = vset.pattern.permute.xlu0 0
      %349 = vperm.xlu0 %348, %v315
      %v350 = vpop.permute.xlu0 %349
      %353 = vset.pattern.permute.xlu0 0
      %354 = vperm.xlu0 %353, %v316
      %v355 = vpop.permute.xlu0 %354
      %v357 = vmul.f32 %v301, %v320
      %v358 = vmul.f32 %v302, %v325
      %v359 = vmul.f32 %v303, %v330
      %v360 = vmul.f32 %v304, %v335
      %v361 = vmul.f32 %v305, %v340
      %v362 = vmul.f32 %v306, %v345
      %v363 = vmul.f32 %v307, %v350
      %v364 = vmul.f32 %v308, %v355
      %v365 = vpack.c.bf16 %v358, %v357
      %v366 = vpack.c.bf16 %v360, %v359
      %v367 = vpack.c.bf16 %v362, %v361
      %v368 = vpack.c.bf16 %v364, %v363
      %v369 = vld [vmem:[#allocation8] sm:$0xf]
      %v370 = vld [vmem:[#allocation8 + $0x4] sm:$0xf]
      %v371 = vld [vmem:[#allocation8 + $0x8] sm:$0xf]
      %v372 = vld [vmem:[#allocation8 + $0xc] sm:$0xf]
      %v373 = vld [vmem:[#allocation8 + $0x10] sm:$0xf]
      %v374 = vld [vmem:[#allocation8 + $0x14] sm:$0xf]
      %v375 = vld [vmem:[#allocation8 + $0x18] sm:$0xf]
      %v376 = vld [vmem:[#allocation8 + $0x1c] sm:$0xf]
      %v377 = vld [vmem:[#allocation11] sm:$0xf]
      %v378 = vld [vmem:[#allocation11 + $0x4] sm:$0xf]
      %v379 = vld [vmem:[#allocation11 + $0x8] sm:$0xf]
      %v380 = vld [vmem:[#allocation11 + $0xc] sm:$0xf]
      %v381 = vld [vmem:[#allocation12] sm:$0xf]
      %v382 = vld [vmem:[#allocation12 + $0x4] sm:$0xf]
      %v383 = vld [vmem:[#allocation12 + $0x8] sm:$0xf]
      %v384 = vld [vmem:[#allocation12 + $0xc] sm:$0xf]
      %v389 = vunpack.c.l.b16 %v381
      %v390 = vunpack.c.l.b16 %v382
      %v391 = vunpack.c.l.b16 %v383
      %v392 = vunpack.c.l.b16 %v384
      %v393 = vpack.c.b16 %v390, %v389
      %v394 = vpack.c.b16 %v392, %v391
      %vm397 = vcmask 261120
      %v399 = vsel %vm397, %v365, 0
      %v402 = vsel %vm397, %v366, 0
      %v405 = vsel %vm397, %v367, 0
      %v408 = vsel %vm397, %v368, 0
      %410 = vmatprep.subr.bf16.mxu0 0
      %411 = vmatpush1.bf16.msra.mxu0 %v393
      %412 = vmatprep.subr.bf16.mxu0 0
      %413 = vmatpush1.bf16.msra.mxu0 %v394
      %414 = vmatprep.subr.bf16.mxu0 0
      %415 = vmatpush1.bf16.msra.mxu0 0
      %416 = vmatprep.subr.bf16.mxu0 0
      %417 = vmatpush1.bf16.msra.mxu0 0
      %418 = vmatprep.subr.bf16.mxu0 0
      %419 = vmatpush1.bf16.msra.mxu0 0
      %420 = vmatprep.subr.bf16.mxu0 0
      %421 = vmatpush1.bf16.msra.mxu0 0
      %422 = vmatprep.subr.bf16.mxu0 0
      %423 = vmatpush1.bf16.msra.mxu0 0
      %424 = vmatprep.subr.bf16.mxu0 0
      %425 = vmatpush1.bf16.msra.mxu0 0
      %426 = vmatprep.subr.bf16.mxu0 0
      %427 = vmatpush1.bf16.msra.mxu0 0
      %428 = vmatprep.subr.bf16.mxu0 0
      %429 = vmatpush1.bf16.msra.mxu0 0
      %430 = vmatprep.subr.bf16.mxu0 0
      %431 = vmatpush1.bf16.msra.mxu0 0
      %432 = vmatprep.subr.bf16.mxu0 0
      %433 = vmatpush1.bf16.msra.mxu0 0
      %434 = vmatprep.subr.bf16.mxu0 0
      %435 = vmatpush1.bf16.msra.mxu0 0
      %436 = vmatprep.subr.bf16.mxu0 0
      %437 = vmatpush1.bf16.msra.mxu0 0
      %438 = vmatprep.subr.bf16.mxu0 0
      %439 = vmatpush1.bf16.msra.mxu0 0
      %440 = vmatprep.subr.bf16.mxu0 0
      %441 = vmatpush1.bf16.msra.mxu0 0
      %442 = vmatprep.mubr.bf16.mxu0 0
      %443 = vmatmul.mubr.bf16.gmra.mrb[0].mxu0 %v399
      %v444 = vpop.f32.mrb[0].mxu0
      %v445 = vadd.f32 0.0, %v444
      %v446 = vpop.f32.mrb[0].mxu0
      %v447 = vpop.f32.mrb[0].mxu0
      %v448 = vadd.f32 0.0, %v447
      %v449 = vpop.f32.mrb[0].mxu0
      %450 = vmatprep.mubr.bf16.mxu0 0
      %451 = vmatmul.mubr.bf16.gmra.mrb[0].mxu0 %v402
      %v452 = vpop.f32.mrb[0].mxu0
      %v453 = vadd.f32 0.0, %v452
      %v454 = vpop.f32.mrb[0].mxu0
      %v455 = vpop.f32.mrb[0].mxu0
      %v456 = vadd.f32 0.0, %v455
      %v457 = vpop.f32.mrb[0].mxu0
      %458 = vmatprep.mubr.bf16.mxu0 0
      %459 = vmatmul.mubr.bf16.gmra.mrb[0].mxu0 %v405
      %v460 = vpop.f32.mrb[0].mxu0
      %v461 = vadd.f32 0.0, %v460
      %v462 = vpop.f32.mrb[0].mxu0
      %v463 = vpop.f32.mrb[0].mxu0
      %v464 = vadd.f32 0.0, %v463
      %v465 = vpop.f32.mrb[0].mxu0
      %466 = vmatprep.mubr.bf16.mxu0 0
      %467 = vmatmul.mubr.bf16.gmra.mrb[0].mxu0 %v408
      %v468 = vpop.f32.mrb[0].mxu0
      %v469 = vadd.f32 0.0, %v468
      %v470 = vpop.f32.mrb[0].mxu0
      %v471 = vpop.f32.mrb[0].mxu0
      %v472 = vadd.f32 0.0, %v471
      %v473 = vpop.f32.mrb[0].mxu0
      %474 = vdwg.mxu0
      %v483 = vunpack.c.l.b16 %v369
      %v484 = vunpack.c.l.b16 %v370
      %v485 = vunpack.c.l.b16 %v371
      %v486 = vunpack.c.l.b16 %v372
      %v487 = vunpack.c.l.b16 %v373
      %v488 = vunpack.c.l.b16 %v374
      %v489 = vunpack.c.l.b16 %v375
      %v490 = vunpack.c.l.b16 %v376
      %v491 = vpack.c.b16 %v484, %v483
      %v492 = vpack.c.b16 %v486, %v485
      %v493 = vpack.c.b16 %v488, %v487
      %v494 = vpack.c.b16 %v490, %v489
      %v499 = vunpack.c.l.b16 %v377
      %v500 = vunpack.c.l.b16 %v378
      %v501 = vunpack.c.l.b16 %v379
      %v502 = vunpack.c.l.b16 %v380
      %v503 = vpack.c.b16 %v500, %v499
      %v504 = vpack.c.b16 %v502, %v501
      %v508 = vsel %vm397, %v491, 0
      %v511 = vsel %vm397, %v492, 0
      %v514 = vsel %vm397, %v493, 0
      %v517 = vsel %vm397, %v494, 0
      %519 = vmatprep.subr.bf16.mxu0 0
      %520 = vmatpush1.bf16.msra.mxu0 %v503
      %521 = vmatprep.subr.bf16.mxu0 0
      %522 = vmatpush1.bf16.msra.mxu0 %v504
      %523 = vmatprep.subr.bf16.mxu0 0
      %524 = vmatpush1.bf16.msra.mxu0 0
      %525 = vmatprep.subr.bf16.mxu0 0
      %526 = vmatpush1.bf16.msra.mxu0 0
      %527 = vmatprep.subr.bf16.mxu0 0
      %528 = vmatpush1.bf16.msra.mxu0 0
      %529 = vmatprep.subr.bf16.mxu0 0
      %530 = vmatpush1.bf16.msra.mxu0 0
      %531 = vmatprep.subr.bf16.mxu0 0
      %532 = vmatpush1.bf16.msra.mxu0 0
      %533 = vmatprep.subr.bf16.mxu0 0
      %534 = vmatpush1.bf16.msra.mxu0 0
      %535 = vmatprep.subr.bf16.mxu0 0
      %536 = vmatpush1.bf16.msra.mxu0 0
      %537 = vmatprep.subr.bf16.mxu0 0
      %538 = vmatpush1.bf16.msra.mxu0 0
      %539 = vmatprep.subr.bf16.mxu0 0
      %540 = vmatpush1.bf16.msra.mxu0 0
      %541 = vmatprep.subr.bf16.mxu0 0
      %542 = vmatpush1.bf16.msra.mxu0 0
      %543 = vmatprep.subr.bf16.mxu0 0
      %544 = vmatpush1.bf16.msra.mxu0 0
      %545 = vmatprep.subr.bf16.mxu0 0
      %546 = vmatpush1.bf16.msra.mxu0 0
      %547 = vmatprep.subr.bf16.mxu0 0
      %548 = vmatpush1.bf16.msra.mxu0 0
      %549 = vmatprep.subr.bf16.mxu0 0
      %550 = vmatpush1.bf16.msra.mxu0 0
      %551 = vmatprep.mubr.bf16.mxu0 0
      %552 = vmatmul.mubr.bf16.gmra.mrb[0].mxu0 %v508
      %v553 = vpop.f32.mrb[0].mxu0
      %v554 = vadd.f32 %v445, %v553
      %v555 = vpop.f32.mrb[0].mxu0
      %v556 = vpop.f32.mrb[0].mxu0
      %v557 = vadd.f32 %v448, %v556
      %v558 = vpop.f32.mrb[0].mxu0
      %559 = vmatprep.mubr.bf16.mxu0 0
      %560 = vmatmul.mubr.bf16.gmra.mrb[0].mxu0 %v511
      %v561 = vpop.f32.mrb[0].mxu0
      %v562 = vadd.f32 %v453, %v561
      %v563 = vpop.f32.mrb[0].mxu0
      %v564 = vpop.f32.mrb[0].mxu0
      %v565 = vadd.f32 %v456, %v564
      %v566 = vpop.f32.mrb[0].mxu0
      %567 = vmatprep.mubr.bf16.mxu0 0
      %568 = vmatmul.mubr.bf16.gmra.mrb[0].mxu0 %v514
      %v569 = vpop.f32.mrb[0].mxu0
      %v570 = vadd.f32 %v461, %v569
      %v571 = vpop.f32.mrb[0].mxu0
      %v572 = vpop.f32.mrb[0].mxu0
      %v573 = vadd.f32 %v464, %v572
      %v574 = vpop.f32.mrb[0].mxu0
      %575 = vmatprep.mubr.bf16.mxu0 0
      %576 = vmatmul.mubr.bf16.gmra.mrb[0].mxu0 %v517
      %v577 = vpop.f32.mrb[0].mxu0
      %v578 = vadd.f32 %v469, %v577
      %v579 = vpop.f32.mrb[0].mxu0
      %v580 = vpop.f32.mrb[0].mxu0
      %v581 = vadd.f32 %v472, %v580
      %v582 = vpop.f32.mrb[0].mxu0
      %583 = vdwg.mxu0
      %v584 = vld [vmem:[#allocation14] sm:$0x1]
      %v586 = vlaneseq
      %v587 = vshrl.u32 %v586, 7
      %v588 = vsub.s32 0, %v587
      %v589 = vrot.slane %v584, %v588
      %v591 = vadd.f32 %v554, %v589
      %v592 = vadd.f32 %v557, %v589
      %v593 = vadd.f32 %v562, %v589
      %v594 = vadd.f32 %v565, %v589
      %v595 = vadd.f32 %v570, %v589
      %v596 = vadd.f32 %v573, %v589
      %v597 = vadd.f32 %v578, %v589
      %v598 = vadd.f32 %v581, %v589
      %v599 = vmax.f32 %v591, 0.0
      %v600 = vmax.f32 %v592, 0.0
      %v601 = vmax.f32 %v593, 0.0
      %v602 = vmax.f32 %v594, 0.0
      %v603 = vmax.f32 %v595, 0.0
      %v604 = vmax.f32 %v596, 0.0
      %v605 = vmax.f32 %v597, 0.0
      %v606 = vmax.f32 %v598, 0.0
      %v607 = vpack.c.bf16 %v600, %v599
      %v608 = vpack.c.bf16 %v602, %v601
      %v609 = vpack.c.bf16 %v604, %v603
      %v610 = vpack.c.bf16 %v606, %v605
      %v615 = vunpack.c.l.b16 %v607
      %v616 = vunpack.c.h.b16 %v607
      %v617 = vunpack.c.l.b16 %v608
      %v618 = vunpack.c.h.b16 %v608
      %v619 = vunpack.c.l.b16 %v609
      %v620 = vunpack.c.h.b16 %v609
      %v621 = vunpack.c.l.b16 %v610
      %v622 = vunpack.c.h.b16 %v610
      %v623 = vpack.c.b16 %v615, %v615
      %v624 = vpack.c.b16 %v616, %v616
      %v625 = vpack.c.b16 %v617, %v617
      %v626 = vpack.c.b16 %v618, %v618
      %v627 = vpack.c.b16 %v619, %v619
      %v628 = vpack.c.b16 %v620, %v620
      %v629 = vpack.c.b16 %v621, %v621
      %v630 = vpack.c.b16 %v622, %v622
      %639 = vst [vmem:[#allocation15] sm:$0xf] %v623
      %640 = vst [vmem:[#allocation15 + $0x4] sm:$0xf] %v624
      %641 = vst [vmem:[#allocation15 + $0x8] sm:$0xf] %v625
      %642 = vst [vmem:[#allocation15 + $0xc] sm:$0xf] %v626
      %643 = vst [vmem:[#allocation15 + $0x10] sm:$0xf] %v627
      %644 = vst [vmem:[#allocation15 + $0x14] sm:$0xf] %v628
      %645 = vst [vmem:[#allocation15 + $0x18] sm:$0xf] %v629
      %646 = vst [vmem:[#allocation15 + $0x1c] sm:$0xf] %v630
    $region69: #{tpu_custom_call.1} parent=1 // pred_fallthru
      _
    // Predicated region
    $region70: #{tpu_custom_call.1} parent=1 // pred_check
      _
    $region71: #{tpu_custom_call.1} parent=1 // pred_check_branch
      %648 = sbr.rel (0) target = $region73
    $region72: #{tpu_custom_call.1} parent=1 // pred_region
      %s650 = ssub.s32 512, 512
      %651 = vsyncadd [#allocation5], %s650
      %s652 = sshll.u32 [#allocation15], 4
      %s653 = int_to_ptr.vmem [resolvable:$true] %s652
      %658 = dma.vmem_to_hbm [thread:$0]  %s653, 512, %s7, [#allocation5], 64, 64, 4
    $region73: #{tpu_custom_call.1} parent=1 // pred_fallthru
      _
    // Predicated region
    $region74: #{tpu_custom_call.1} parent=1 // pred_check
      _
    $region75: #{tpu_custom_call.1} parent=1 // pred_check_branch
      %660 = sbr.rel (0) target = $region77
    $region76: #{tpu_custom_call.1} parent=1 // pred_region
      %661 = dma.done [#allocation5], 512
    $region77: #{tpu_custom_call.1} parent=1 // pred_fallthru
      _
    %662 = vsyncpa [#allocation4], 1
    %663 = vsyncpa [#allocation7], 1
    %664 = vsyncpa [#allocation10], 1
    %665 = vsyncpa [#allocation13], 1
    %666 = vsyncpa [#allocation5], 1

</llo_original>
